<compile_context>
chip_gen: v7x
topology: tpu7x:2x2x1
jax: 0.10.0
libtpu: 0.0.40
codegen_flags: <defaults>
</compile_context>

<pallas_src>
import functools

import jax
import jax.numpy as jnp
from jax.experimental import pallas as pl
from jax.experimental.pallas import tpu as pltpu


def _embed_kernel(patch_ref, w_ref, posbias_ref, kp_ref, out_ref, *,
                  num_keypoints, row_tile):
    """One grid step: one patch tile -> rows [K + i*row_tile, ...) of the output.

    patch_ref:   (row_tile, patch_dim)  VMEM, compute dtype (bf16 or f32)
    w_ref:       (patch_dim, dim)       VMEM, compute dtype (replicated)
    posbias_ref: (row_tile, dim)        VMEM, f32 (bias + pos_embedding[K:])
    kp_ref:      (K, dim)               VMEM, f32 (keypoint_token + pos[:K])
    out_ref:     (K + N, dim)           VMEM, f32 (full per-batch sequence,
                                        resident across the i axis)
    """
    i = pl.program_id(1)

    # Keypoint rows are batch-invariant: write them once per batch element.
    @pl.when(i == 0)
    def _():
        out_ref[pl.ds(0, num_keypoints), :] = kp_ref[...]

    acc = jnp.dot(patch_ref[...], w_ref[...],
                  preferred_element_type=jnp.float32)
    rows = acc + posbias_ref[...]          # f32 epilogue (no bf16 VPU on v5e)
    off = num_keypoints + pl.multiple_of(i * row_tile, row_tile)
    out_ref[pl.ds(off, row_tile), :] = rows.astype(out_ref.dtype)


def _pick_row_tile(num_patches, op_bytes, max_rows=512):
    """Largest sublane-aligned divisor of N that is <= max_rows (else N)."""
    align = 16 if op_bytes == 2 else 8
    if num_patches <= max_rows or num_patches % align != 0:
        return num_patches                 # full extent is always a legal block
    rt = (max_rows // align) * align
    while rt > align and num_patches % rt != 0:
        rt -= align
    return rt if num_patches % rt == 0 else num_patches


def tokenpose_base_forward(feature, w, b, keypoint_token, pos_embedding,
                           patch_size, *, row_tile=None,
                           compute_dtype=jnp.bfloat16):
    """feature: (B, C, H, W) float32 (PyTorch NCHW convention).

    Returns (B, K + N, dim) == dropout(concat(kp_tokens, patch_emb) + pos, p=0).
    """
    B, C, H, W = feature.shape
    p1, p2 = patch_size
    h, w_ = H // p1, W // p2
    N = h * w_
    patch_dim = C * p1 * p2
    K, dim = keypoint_token.shape
    op_bytes = jnp.dtype(compute_dtype).itemsize

    # --- glue (XLA): einops 'b c (h p1) (w p2) -> b (h w) (p1 p2 c)'
    x = feature.reshape(B, C, h, p1, w_, p2)
    x = jnp.transpose(x, (0, 2, 4, 3, 5, 1))            # b h w p1 p2 c
    patches = x.reshape(B, N, patch_dim).astype(compute_dtype)
    w_op = w.astype(compute_dtype)

    # Fold bias + patch-row position embedding once (f32, NOT batch-tiled);
    # keypoint rows folded with their position embedding (f32).
    posbias = (b[None, :] + pos_embedding[K:, :]).astype(jnp.float32)   # (N, dim)
    kp_rows = (keypoint_token + pos_embedding[:K, :]).astype(jnp.float32)  # (K, dim)

    if row_tile is None:
        row_tile = _pick_row_tile(N, op_bytes)
    assert N % row_tile == 0, "row_tile must divide the number of patches"
    if row_tile != N:
        align = 16 if op_bytes == 2 else 8
        assert row_tile % align == 0, (
            f"row_tile must be a multiple of {align} for dtype {compute_dtype}")
    grid_n = N // row_tile

    # Double-buffered pipeline footprint with headroom, capped at 48 MiB so a
    # tile tuned on v5e/v6e (128 MiB VMEM) still fits v7x (64 MiB physical).
    footprint = (2 * row_tile * patch_dim * op_bytes        # patches
                 + 2 * patch_dim * dim * op_bytes           # W (replicated)
                 + 2 * row_tile * dim * 4                   # posbias
                 + 2 * K * dim * 4                          # kp rows
                 + 2 * (K + N) * dim * 4)                   # resident output
    vmem_limit = int(min(max(4 * footprint, 16 << 20), 48 << 20))

    cost = pl.CostEstimate(
        flops=2 * B * N * patch_dim * dim,
        transcendentals=0,
        bytes_accessed=(op_bytes * (B * N * patch_dim + patch_dim * dim)
                        + 4 * (N * dim + K * dim + B * (K + N) * dim)),
    )

    kernel = functools.partial(_embed_kernel, num_keypoints=K,
                               row_tile=row_tile)

    out = pl.pallas_call(
        kernel,
        out_shape=jax.ShapeDtypeStruct((B, K + N, dim), jnp.float32),
        grid_spec=pltpu.PrefetchScalarGridSpec(
            num_scalar_prefetch=0,
            grid=(B, grid_n),
            in_specs=[
                pl.BlockSpec((None, row_tile, patch_dim),
                             lambda bi, i: (bi, i, 0)),
                pl.BlockSpec((patch_dim, dim), lambda bi, i: (0, 0)),
                pl.BlockSpec((row_tile, dim), lambda bi, i: (i, 0)),
                pl.BlockSpec((K, dim), lambda bi, i: (0, 0)),
            ],
            out_specs=pl.BlockSpec((None, K + N, dim),
                                   lambda bi, i: (bi, 0, 0)),
        ),
        compiler_params=pltpu.CompilerParams(
            dimension_semantics=("parallel", "arbitrary"),
            vmem_limit_bytes=vmem_limit),
        cost_estimate=cost,
    )(patches, w_op, posbias, kp_rows)

    # dropout(p=0.0) == identity
    return out


def _reference(feature, w, b, keypoint_token, pos_embedding, patch_size):
    B, C, H, W = feature.shape
    p1, p2 = patch_size
    h, w_ = H // p1, W // p2
    x = feature.reshape(B, C, h, p1, w_, p2)
    x = jnp.transpose(x, (0, 2, 4, 3, 5, 1)).reshape(B, h * w_, C * p1 * p2)
    emb = x @ w + b                                       # (B, N, dim)
    K = keypoint_token.shape[0]
    kp = jnp.broadcast_to(keypoint_token[None], (B, K, w.shape[1]))
    seqed = jnp.concatenate([kp, emb], axis=1)
    return seqed + pos_embedding[None]


if __name__ == "__main__":
    # Module hyperparameters (small, consistent with TokenPoseBase.__init__):
    feature_size = [16, 16]
    patch_size = [4, 4]
    channels = 4
    num_keypoints = 8
    dim = 32
    patch_scale = 1
    B = 2

    h = feature_size[0] // (patch_scale * patch_size[0])
    w_ = feature_size[1] // (patch_scale * patch_size[1])
    num_patches = h * w_                                   # 16
    patch_dim = channels * patch_size[0] * patch_size[1]   # 64
    seq = num_keypoints + num_patches                      # 24

    key = jax.random.PRNGKey(0)
    k_feat, k_w, k_b, k_kp, k_pos = jax.random.split(key, 5)

    # deterministic synthetic parameter init (trunc_normal std=0.02 ~ normal*0.02)
    feature = jax.random.normal(
        k_feat, (B, channels, feature_size[0], feature_size[1]), jnp.float32)
    w = jax.random.normal(k_w, (patch_dim, dim), jnp.float32) * 0.02
    b = jax.random.normal(k_b, (dim,), jnp.float32) * 0.02
    keypoint_token = jax.random.normal(k_kp, (num_keypoints, dim),
                                       jnp.float32) * 0.02
    pos_embedding = jax.random.normal(k_pos, (seq, dim), jnp.float32) * 0.02

    ref = _reference(feature, w, b, keypoint_token, pos_embedding, patch_size)

    # Exact-match path (f32 operands) against the f32 reference.
    out_f32 = jax.block_until_ready(tokenpose_base_forward(
        feature, w, b, keypoint_token, pos_embedding, patch_size,
        compute_dtype=jnp.float32))
    assert out_f32.shape == (B, seq, dim)
    assert jnp.allclose(out_f32, ref, atol=1e-5, rtol=1e-5)

    # Production path: bf16 MXU operands, f32 accumulation + epilogue.
    out_bf16 = jax.block_until_ready(tokenpose_base_forward(
        feature, w, b, keypoint_token, pos_embedding, patch_size,
        compute_dtype=jnp.bfloat16))
    assert out_bf16.shape == (B, seq, dim)
    assert jnp.allclose(out_bf16, ref, atol=2e-2, rtol=2e-2)

    print("KERNEL_OK")
</pallas_src>

<mosaic_0001>
module attributes {stable_mosaic.version = 11 : i64} {
  func.func @_embed_kernel(%arg0: i32, %arg1: i32, %arg2: memref<1x16x64xf32, #tpu.memory_space<vmem>>, %arg3: memref<64x32xf32, #tpu.memory_space<vmem>>, %arg4: memref<16x32xf32, #tpu.memory_space<vmem>>, %arg5: memref<8x32xf32, #tpu.memory_space<vmem>>, %arg6: memref<1x24x32xf32, #tpu.memory_space<vmem>>) attributes {dimension_semantics = [#tpu.dimension_semantics<parallel>, #tpu.dimension_semantics<arbitrary>], iteration_bounds = array<i64: 2, 1>, scalar_prefetch = 0 : i64, scratch_operands = 0 : i64, tpu.core_type = #tpu.core_type<tc>, window_params = [{transform_indices = @transform_0, window_bounds = array<i64: 1, 16, 64>}, {pipeline_mode = #tpu.pipeline_mode<synchronous>, transform_indices = @transform_1, window_bounds = array<i64: 64, 32>}, {transform_indices = @transform_2, window_bounds = array<i64: 16, 32>}, {pipeline_mode = #tpu.pipeline_mode<synchronous>, transform_indices = @transform_3, window_bounds = array<i64: 8, 32>}, {transform_indices = @transform_4, window_bounds = array<i64: 1, 24, 32>}]} {
    %c0_i32 = arith.constant 0 : i32
    %0 = arith.cmpi eq, %arg1, %c0_i32 : i32
    %1 = arith.extui %0 : i1 to i32
    %c0_i32_0 = arith.constant 0 : i32
    %2 = arith.cmpi ne, %1, %c0_i32_0 : i32
    scf.if %2 {
      %c0_9 = arith.constant 0 : index
      %c0_10 = arith.constant 0 : index
      %16 = vector.load %arg5[%c0_9, %c0_10] : memref<8x32xf32, #tpu.memory_space<vmem>>, vector<8x32xf32>
      %c0_11 = arith.constant 0 : index
      %c0_12 = arith.constant 0 : index
      %c0_13 = arith.constant 0 : index
      %17 = vector.load %arg6[%c0_11, %c0_12, %c0_13] : memref<1x24x32xf32, #tpu.memory_space<vmem>>, vector<1x8x32xf32>
      %18 = vector.shape_cast %17 : vector<1x8x32xf32> to vector<8x32xf32>
      %19 = vector.shape_cast %16 : vector<8x32xf32> to vector<1x8x32xf32>
      tpu.vector_store %arg6[%c0_11, %c0_12, %c0_13], %19 {strides = array<i32>} : memref<1x24x32xf32, #tpu.memory_space<vmem>>, vector<1x8x32xf32>,
    } else {
    }
    %c0 = arith.constant 0 : index
    %c0_1 = arith.constant 0 : index
    %c0_2 = arith.constant 0 : index
    %3 = vector.load %arg2[%c0, %c0_1, %c0_2] : memref<1x16x64xf32, #tpu.memory_space<vmem>>, vector<1x16x64xf32>
    %4 = vector.shape_cast %3 : vector<1x16x64xf32> to vector<16x64xf32>
    %c0_3 = arith.constant 0 : index
    %c0_4 = arith.constant 0 : index
    %5 = vector.load %arg3[%c0_3, %c0_4] : memref<64x32xf32, #tpu.memory_space<vmem>>, vector<64x32xf32>
    %cst = arith.constant dense<0.000000e+00> : vector<16x32xf32>
    %6 = tpu.matmul %4, %5, %cst {dimension_numbers = #tpu.dot_dimension_numbers<[1], [0], [0], [1], [0, 0, 1, 1], [], []>} : vector<16x64xf32>, vector<64x32xf32>, vector<16x32xf32> -> vector<16x32xf32>
    %c0_5 = arith.constant 0 : index
    %c0_6 = arith.constant 0 : index
    %7 = vector.load %arg4[%c0_5, %c0_6] : memref<16x32xf32, #tpu.memory_space<vmem>>, vector<16x32xf32>
    %8 = arith.addf %6, %7 : vector<16x32xf32>
    %c16_i32 = arith.constant 16 : i32
    %9 = arith.muli %arg1, %c16_i32 : i32
    %10 = tpu.assume_multiple %9, 16 : i32
    %c8_i32 = arith.constant 8 : i32
    %11 = arith.addi %c8_i32, %10 : i32
    %c0_7 = arith.constant 0 : index
    %12 = arith.index_cast %11 : i32 to index
    %c0_8 = arith.constant 0 : index
    %13 = vector.load %arg6[%c0_7, %12, %c0_8] : memref<1x24x32xf32, #tpu.memory_space<vmem>>, vector<1x16x32xf32>
    %14 = vector.shape_cast %13 : vector<1x16x32xf32> to vector<16x32xf32>
    %15 = vector.shape_cast %8 : vector<16x32xf32> to vector<1x16x32xf32>
    tpu.vector_store %arg6[%c0_7, %12, %c0_8], %15 {strides = array<i32>} : memref<1x24x32xf32, #tpu.memory_space<vmem>>, vector<1x16x32xf32>,
    return
  }
  func.func @transform_0(%arg0: i32, %arg1: i32) -> (i32, i32, i32) {
    %c0_i32 = arith.constant 0 : i32
    %c0_i32_0 = arith.constant 0 : i32
    return %arg0, %arg1, %c0_i32 : i32, i32, i32
  }
  func.func @transform_1(%arg0: i32, %arg1: i32) -> (i32, i32) {
    %c0_i32 = arith.constant 0 : i32
    %c0_i32_0 = arith.constant 0 : i32
    %c0_i32_1 = arith.constant 0 : i32
    return %c0_i32, %c0_i32_0 : i32, i32
  }
  func.func @transform_2(%arg0: i32, %arg1: i32) -> (i32, i32) {
    %c0_i32 = arith.constant 0 : i32
    %c0_i32_0 = arith.constant 0 : i32
    return %arg1, %c0_i32 : i32, i32
  }
  func.func @transform_3(%arg0: i32, %arg1: i32) -> (i32, i32) {
    %c0_i32 = arith.constant 0 : i32
    %c0_i32_0 = arith.constant 0 : i32
    %c0_i32_1 = arith.constant 0 : i32
    return %c0_i32, %c0_i32_0 : i32, i32
  }
  func.func @transform_4(%arg0: i32, %arg1: i32) -> (i32, i32, i32) {
    %c0_i32 = arith.constant 0 : i32
    %c0_i32_0 = arith.constant 0 : i32
    %c0_i32_1 = arith.constant 0 : i32
    return %arg0, %c0_i32, %c0_i32_0 : i32, i32, i32
  }
}

</mosaic_0001>

<llo_original>
// kernel: tpu_custom_call.1
$region0: #{tpu_custom_call.1}
  #allocation0 [shape = 'u32[]', space=smem, size = 0x4, offset = 0x4, fixed_abs, tag = 'smem constant byte address 0x4 - core index']
  #allocation1 [shape = 'u32[144,128]{1,0:T(1,128)}', space=vmem, size = 0x12000, scoped, tag = 'internal scratch']
  %s0 = inlined_call_operand.vmem [shape: f32[2,16,64], index: 0, kind: input, shape index: {}]
  %s1 = inlined_call_operand.vmem [shape: f32[64,32], index: 1, kind: input, shape index: {}]
  %s2 = inlined_call_operand.vmem [shape: f32[16,32], index: 2, kind: input, shape index: {}]
  %s3 = inlined_call_operand.vmem [shape: f32[8,32], index: 3, kind: input, shape index: {}]
  %s4 = inlined_call_operand.hbm [shape: f32[2,24,32], index: 4, kind: output, shape index: {}]
  %s5 = sld [smem:[#allocation0]]
  $region53: #{tpu_custom_call.1} parent=0
    _
  %s7 = ssub.s32 1, %s5
  %s8 = scalar_select 0, %s7, %s5
  $region1: #{tpu_custom_call.1} parent=0
    #allocation2 [shape = 'u8[24576]{0}', space=vmem, size = 0x6000, scoped, tag = 'output window, operand 0']
    #allocation3 [shape = 's32[2]{0}', space=sflag, size = 0x8, scoped, tag = 'scoped memory for tpu_custom_call.1']
    %9 = vsyncpa [#allocation3], 0
    %s10 = scalar_lea.sflag [#allocation3], 1
    %11 = vsyncpa %s10, 0
    loop: start=0, step=1, limit=4
    $region2: #{tpu_custom_call.1} parent=1 // loop_pre_header
      _
    $region3: #{tpu_custom_call.1} parent=1 // loop_header
      %s13 = sphi 0, %s17
      %p14 = scmp.ge.s32.totalorder %s13, 4
      %s20 = sphi 0, %s32
      %s21 = sphi 0, %s28
      %s22 = sphi 0, %s20
      %s23 = sphi 0, %s21
      %s24 = sphi 0, %s22
      %s25 = sphi 0, %s23
      %s37 = sphi 0, %s39
      %s40 = sphi 0, %s37
      %s41 = sphi 0, %s40
      %s57 = sphi 0, %s41
      %s61 = sphi 0, %s61
      %s63 = sphi 0, %s61
      %s64 = sphi 0, %s63
      %s78 = sphi 0, %s64
      %s84 = sphi 0, %s86
      %s87 = sphi 0, %s84
      %s88 = sphi 0, %s87
      %s104 = sphi 0, %s88
      %s108 = sphi 0, %s108
      %s110 = sphi 0, %s108
      %s111 = sphi 0, %s110
      %s125 = sphi 0, %s111
      %s131 = sphi 0, %s133
      %s134 = sphi 0, %s131
      %s135 = sphi 0, %s134
      %s151 = sphi 0, %s135
    $region4: #{tpu_custom_call.1} parent=1 // loop_header_branch
      %16 = sbr.rel (%p14) target = $region8
    $region5: #{tpu_custom_call.1} parent=1 // loop_body
      %s18 = ssub.s32 %s13, 1
      %s19 = ssub.s32 %s13, 2
      %s26 = sadd.s32 1, %s21
      %p27 = scmp.ge.s32.totalorder %s26, 1
      %s28 = scalar_select %p27, 0, %s26
      %s29 = sadd.s32 1, %s20
      %s30 = scalar_select %p27, %s29, %s20
      %p31 = scmp.ge.s32.totalorder %s30, 2
      %s32 = scalar_select %p31, 0, %s30
      %s33 = ssub.s32 %s20, %s32
      %s34 = ssub.s32 %s21, %s28
      %s35 = sor.u32 %s33, %s34
      %p36 = scmp.eq.s32.totalorder %s35, 0
      %s38 = sadd.s32 %s37, 1
      %s39 = scalar_select %p36, %s37, %s38
      %p42 = pneg %p36
      %p43 = scmp.eq.s32.totalorder %s13, 1
      %p44 = por %p42, %p43
      %p45 = scmp.ne.s32.totalorder %s37, %s40
      %p46 = scmp.eq.s32.totalorder %s13, 0
      %p47 = por %p45, %p46
      %p48 = scmp.ne.s32.totalorder %s37, %s40
      %p49 = scmp.eq.s32.totalorder %s18, 1
      %p50 = por %p48, %p49
      %p51 = scmp.ne.s32.totalorder %s40, %s41
      %p52 = scmp.eq.s32.totalorder %s18, 0
      %p53 = por %p51, %p52
      %p54 = scmp.ne.s32.totalorder %s40, %s41
      %p55 = scmp.eq.s32.totalorder %s19, 1
      %p56 = por %p54, %p55
      %p58 = scmp.ne.s32.totalorder %s41, %s57
      %p59 = scmp.eq.s32.totalorder %s19, 0
      %p60 = por %p58, %p59
      %s62 = sadd.s32 %s61, 1
      %p65 = scmp.eq.s32.totalorder %s13, 1
      %p66 = scmp.ne.s32.totalorder %s61, %s63
      %p67 = scmp.eq.s32.totalorder %s13, 0
      %p68 = por %p66, %p67
      %p69 = scmp.ne.s32.totalorder %s61, %s63
      %p70 = scmp.eq.s32.totalorder %s18, 1
      %p71 = por %p69, %p70
      %p72 = scmp.ne.s32.totalorder %s63, %s64
      %p73 = scmp.eq.s32.totalorder %s18, 0
      %p74 = por %p72, %p73
      %p75 = scmp.ne.s32.totalorder %s63, %s64
      %p76 = scmp.eq.s32.totalorder %s19, 1
      %p77 = por %p75, %p76
      %p79 = scmp.ne.s32.totalorder %s64, %s78
      %p80 = scmp.eq.s32.totalorder %s19, 0
      %p81 = por %p79, %p80
      %s82 = ssub.s32 %s21, %s28
      %p83 = scmp.eq.s32.totalorder %s82, 0
      %s85 = sadd.s32 %s84, 1
      %s86 = scalar_select %p83, %s84, %s85
      %p89 = pneg %p83
      %p90 = scmp.eq.s32.totalorder %s13, 1
      %p91 = por %p89, %p90
      %p92 = scmp.ne.s32.totalorder %s84, %s87
      %p93 = scmp.eq.s32.totalorder %s13, 0
      %p94 = por %p92, %p93
      %p95 = scmp.ne.s32.totalorder %s84, %s87
      %p96 = scmp.eq.s32.totalorder %s18, 1
      %p97 = por %p95, %p96
      %p98 = scmp.ne.s32.totalorder %s87, %s88
      %p99 = scmp.eq.s32.totalorder %s18, 0
      %p100 = por %p98, %p99
      %p101 = scmp.ne.s32.totalorder %s87, %s88
      %p102 = scmp.eq.s32.totalorder %s19, 1
      %p103 = por %p101, %p102
      %p105 = scmp.ne.s32.totalorder %s88, %s104
      %p106 = scmp.eq.s32.totalorder %s19, 0
      %p107 = por %p105, %p106
      %s109 = sadd.s32 %s108, 1
      %p112 = scmp.eq.s32.totalorder %s13, 1
      %p113 = scmp.ne.s32.totalorder %s108, %s110
      %p114 = scmp.eq.s32.totalorder %s13, 0
      %p115 = por %p113, %p114
      %p116 = scmp.ne.s32.totalorder %s108, %s110
      %p117 = scmp.eq.s32.totalorder %s18, 1
      %p118 = por %p116, %p117
      %p119 = scmp.ne.s32.totalorder %s110, %s111
      %p120 = scmp.eq.s32.totalorder %s18, 0
      %p121 = por %p119, %p120
      %p122 = scmp.ne.s32.totalorder %s110, %s111
      %p123 = scmp.eq.s32.totalorder %s19, 1
      %p124 = por %p122, %p123
      %p126 = scmp.ne.s32.totalorder %s111, %s125
      %p127 = scmp.eq.s32.totalorder %s19, 0
      %p128 = por %p126, %p127
      %s129 = ssub.s32 %s20, %s32
      %p130 = scmp.eq.s32.totalorder %s129, 0
      %s132 = sadd.s32 %s131, 1
      %s133 = scalar_select %p130, %s131, %s132
      %p136 = pneg %p130
      %p137 = scmp.eq.s32.totalorder %s13, 1
      %p138 = por %p136, %p137
      %p139 = scmp.ne.s32.totalorder %s131, %s134
      %p140 = scmp.eq.s32.totalorder %s13, 0
      %p141 = por %p139, %p140
      %p142 = scmp.ne.s32.totalorder %s131, %s134
      %p143 = scmp.eq.s32.totalorder %s18, 1
      %p144 = por %p142, %p143
      %p145 = scmp.ne.s32.totalorder %s134, %s135
      %p146 = scmp.eq.s32.totalorder %s18, 0
      %p147 = por %p145, %p146
      %p148 = scmp.ne.s32.totalorder %s134, %s135
      %p149 = scmp.eq.s32.totalorder %s19, 1
      %p150 = por %p148, %p149
      %p152 = scmp.ne.s32.totalorder %s135, %s151
      %p153 = scmp.eq.s32.totalorder %s19, 0
      %p154 = por %p152, %p153
      %p155 = scmp.le.s32.totalorder 1, %s13
      %p156 = scmp.lt.s32.totalorder %s13, 3
      %p157 = pnand %p155, %p156
      %p158 = pneg %p157
      // Predicated region
      $region9: #{tpu_custom_call.1} parent=5 // pred_check
        _
      $region10: #{tpu_custom_call.1} parent=5 // pred_check_branch
        %160 = sbr.rel (%p157) target = $region12
      $region11: #{tpu_custom_call.1} parent=5 // pred_region
        %s161 = ssub.s32 %s13, 1
        // Predicated region
        $region13: #{tpu_custom_call.1} parent=11 // pred_check
          %p162 = pneg %p74
        $region14: #{tpu_custom_call.1} parent=11 // pred_check_branch
          %164 = sbr.rel (%p162) target = $region16
        $region15: #{tpu_custom_call.1} parent=11 // pred_region
          _
        $region16: #{tpu_custom_call.1} parent=11 // pred_fallthru
          _
        // Predicated region
        $region17: #{tpu_custom_call.1} parent=11 // pred_check
          %p165 = pneg %p100
        $region18: #{tpu_custom_call.1} parent=11 // pred_check_branch
          %167 = sbr.rel (%p165) target = $region20
        $region19: #{tpu_custom_call.1} parent=11 // pred_region
          %s168 = smul.u32 2, %s23
          %p169 = scmp.lt.s32.totalorder %s168, 1
          %s170 = scalar_select %p169, %s168, 1
          %s171 = smul.addr %s170, 8
          %s172 = scalar_lea.vmem %s2, %s171
          %s173 = smul.u32 2, %s23
        $region20: #{tpu_custom_call.1} parent=11 // pred_fallthru
          _
        // Predicated region
        $region21: #{tpu_custom_call.1} parent=11 // pred_check
          %p174 = pneg %p121
        $region22: #{tpu_custom_call.1} parent=11 // pred_check_branch
          %176 = sbr.rel (%p174) target = $region24
        $region23: #{tpu_custom_call.1} parent=11 // pred_region
          _
        $region24: #{tpu_custom_call.1} parent=11 // pred_fallthru
          _
      $region12: #{tpu_custom_call.1} parent=5 // pred_fallthru
        _
      %p177 = scmp.lt.s32.totalorder %s13, 2
      // Predicated region
      $region25: #{tpu_custom_call.1} parent=5 // pred_check
        %p178 = pneg %p177
      $region26: #{tpu_custom_call.1} parent=5 // pred_check_branch
        %180 = sbr.rel (%p178) target = $region28
      $region27: #{tpu_custom_call.1} parent=5 // pred_region
        // Predicated region
        $region29: #{tpu_custom_call.1} parent=27 // pred_check
          %p181 = pneg %p47
        $region30: #{tpu_custom_call.1} parent=27 // pred_check_branch
          %183 = sbr.rel (%p181) target = $region32
        $region31: #{tpu_custom_call.1} parent=27 // pred_region
          %s184 = smul.u32 2, %s21
          %p185 = scmp.lt.s32.totalorder %s20, 1
          %s186 = scalar_select %p185, %s20, 1
          %p187 = scmp.lt.s32.totalorder %s184, 1
          %s188 = scalar_select %p187, %s184, 1
          %s189 = smul.addr %s186, 2
          %s190 = sadd.s32 %s188, %s189
          %s191 = smul.addr %s190, 8
          %s192 = scalar_lea.vmem %s0, %s191
          %s193 = smul.u32 2, %s21
        $region32: #{tpu_custom_call.1} parent=27 // pred_fallthru
          _
      $region28: #{tpu_custom_call.1} parent=5 // pred_fallthru
        _
      %p194 = scmp.le.s32.totalorder 1, %s13
      %p195 = scmp.lt.s32.totalorder %s13, 3
      %p196 = pnand %p194, %p195
      %p197 = pneg %p196
      // Predicated region
      $region33: #{tpu_custom_call.1} parent=5 // pred_check
        _
      $region34: #{tpu_custom_call.1} parent=5 // pred_check_branch
        %199 = sbr.rel (%p196) target = $region36
      $region35: #{tpu_custom_call.1} parent=5 // pred_region
        %s200 = ssub.s32 %s13, 1
        %s201 = smul.u32 2, %s23
        %p202 = scmp.lt.s32.totalorder %s22, 1
        %s203 = scalar_select %p202, %s22, 1
        %p204 = scmp.lt.s32.totalorder %s201, 1
        %s205 = scalar_select %p204, %s201, 1
        %s206 = smul.addr %s203, 2
        %s207 = sadd.s32 %s205, %s206
        %s208 = smul.addr %s207, 8
        %s209 = scalar_lea.vmem %s0, %s208
        %p210 = pneg %p53
        %p211 = pneg %p50
        %p212 = pneg %p74
        %p213 = pneg %p71
        %s214 = smul.u32 2, %s23
        %p215 = scmp.lt.s32.totalorder %s214, 1
        %s216 = scalar_select %p215, %s214, 1
        %s217 = smul.addr %s216, 8
        %s218 = scalar_lea.vmem %s2, %s217
        %p219 = pneg %p100
        %p220 = pneg %p97
        %p221 = pneg %p121
        %p222 = pneg %p118
        %p223 = pneg %p147
        %p224 = pneg %p144
        %s225 = sand.u32 %s134, 1
        %s226 = scalar_lea.sflag [#allocation3], %s225
        %s227 = sand.u32 %s134, 1
        %s228 = smul.addr %s227, 24
        %s229 = scalar_lea.vmem [#allocation2], %s228
        %s230 = smul.u32 2, %s23
        %p231 = scmp.lt.s32.totalorder %s22, 1
        %s232 = scalar_select %p231, %s22, 1
        %p233 = scmp.lt.s32.totalorder %s230, 1
        %s234 = scalar_select %p233, %s230, 1
        %s235 = smul.addr %s232, 2
        %s236 = sadd.s32 %s234, %s235
        %s237 = smul.addr %s236, 8
        %s238 = scalar_lea.vmem %s0, %s237
        %s239 = smul.u32 2, %s23
        %s240 = smul.u32 2, %s23
        %p241 = scmp.lt.s32.totalorder %s240, 1
        %s242 = scalar_select %p241, %s240, 1
        %s243 = smul.addr %s242, 8
        %s244 = scalar_lea.vmem %s2, %s243
        %s245 = smul.u32 2, %s23
        %p246 = scmp.eq.s32.totalorder %s23, 0
        // Predicated region
        $region37: #{tpu_custom_call.1} parent=35 // pred_check
          %p247 = pneg %p246
        $region38: #{tpu_custom_call.1} parent=35 // pred_check_branch
          %249 = sbr.rel (%p247) target = $region40
        $region39: #{tpu_custom_call.1} parent=35 // pred_region
          %v250 = vld [vmem:[%s3] sm:$0xff]
          %vm251 = vcmask 261120
          %252 = vst.msk [vmem:[%s229] sm:$0xff] %vm251, %v250
        $region40: #{tpu_custom_call.1} parent=35 // pred_fallthru
          _
        %v253 = vld [vmem:[%s238] sm:$0xff]
        %v254 = vld [vmem:[%s238 + $0x8] sm:$0xff]
        %v255 = vld [vmem:[%s1] sm:$0xff]
        %v256 = vld [vmem:[%s1 + $0x8] sm:$0xff]
        %v257 = vld [vmem:[%s1 + $0x10] sm:$0xff]
        %v258 = vld [vmem:[%s1 + $0x18] sm:$0xff]
        %v259 = vld [vmem:[%s1 + $0x20] sm:$0xff]
        %v260 = vld [vmem:[%s1 + $0x28] sm:$0xff]
        %v261 = vld [vmem:[%s1 + $0x30] sm:$0xff]
        %v262 = vld [vmem:[%s1 + $0x38] sm:$0xff]
        %v263 = vld [vmem:[%s244] sm:$0xff]
        %v264 = vld [vmem:[%s244 + $0x8] sm:$0xff]
        %vm265 = vcmask 523264
        %v267 = vsel %vm265, %v253, 0
        %v270 = vsel %vm265, %v254, 0
        %272 = vmatprep.subr.mxu0 0.0
        %273 = vmatpush1.msra.mxu0 %v255
        %274 = vmatprep.subr.mxu0 0.0
        %275 = vmatpush1.msra.mxu0 %v256
        %276 = vmatprep.subr.mxu0 0.0
        %277 = vmatpush1.msra.mxu0 %v257
        %278 = vmatprep.subr.mxu0 0.0
        %279 = vmatpush1.msra.mxu0 %v258
        %280 = vmatprep.subr.mxu0 0.0
        %281 = vmatpush1.msra.mxu0 %v259
        %282 = vmatprep.subr.mxu0 0.0
        %283 = vmatpush1.msra.mxu0 %v260
        %284 = vmatprep.subr.mxu0 0.0
        %285 = vmatpush1.msra.mxu0 %v261
        %286 = vmatprep.subr.mxu0 0.0
        %287 = vmatpush1.msra.mxu0 %v262
        %288 = vmatprep.subr.mxu0 0.0
        %289 = vmatpush1.msra.mxu0 0.0
        %290 = vmatprep.subr.mxu0 0.0
        %291 = vmatpush1.msra.mxu0 0.0
        %292 = vmatprep.subr.mxu0 0.0
        %293 = vmatpush1.msra.mxu0 0.0
        %294 = vmatprep.subr.mxu0 0.0
        %295 = vmatpush1.msra.mxu0 0.0
        %296 = vmatprep.subr.mxu0 0.0
        %297 = vmatpush1.msra.mxu0 0.0
        %298 = vmatprep.subr.mxu0 0.0
        %299 = vmatpush1.msra.mxu0 0.0
        %300 = vmatprep.subr.mxu0 0.0
        %301 = vmatpush1.msra.mxu0 0.0
        %302 = vmatprep.subr.mxu0 0.0
        %303 = vmatpush1.msra.mxu0 0.0
        %304 = vmatprep.subr.mxu0 0.0
        %305 = vmatpush1.msra.mxu0 0.0
        %306 = vmatprep.subr.mxu0 0.0
        %307 = vmatpush1.msra.mxu0 0.0
        %308 = vmatprep.subr.mxu0 0.0
        %309 = vmatpush1.msra.mxu0 0.0
        %310 = vmatprep.subr.mxu0 0.0
        %311 = vmatpush1.msra.mxu0 0.0
        %312 = vmatprep.subr.mxu0 0.0
        %313 = vmatpush1.msra.mxu0 0.0
        %314 = vmatprep.subr.mxu0 0.0
        %315 = vmatpush1.msra.mxu0 0.0
        %316 = vmatprep.subr.mxu0 0.0
        %317 = vmatpush1.msra.mxu0 0.0
        %318 = vmatprep.subr.mxu0 0.0
        %319 = vmatpush1.msra.mxu0 0.0
        %320 = vmatprep.subr.mxu0 0.0
        %321 = vmatpush1.msra.mxu0 0.0
        %322 = vmatprep.subr.mxu0 0.0
        %323 = vmatpush1.msra.mxu0 0.0
        %324 = vmatprep.subr.mxu0 0.0
        %325 = vmatpush1.msra.mxu0 0.0
        %326 = vmatprep.subr.mxu0 0.0
        %327 = vmatpush1.msra.mxu0 0.0
        %328 = vmatprep.subr.mxu0 0.0
        %329 = vmatpush1.msra.mxu0 0.0
        %330 = vmatprep.subr.mxu0 0.0
        %331 = vmatpush1.msra.mxu0 0.0
        %332 = vmatprep.subr.mxu0 0.0
        %333 = vmatpush1.msra.mxu0 0.0
        %334 = vmatprep.subr.mxu0 0.0
        %335 = vmatpush1.msra.mxu0 0.0
        %336 = vmatprep.mubr.f32.mxu0 0.0
        %337 = vmatmul.mubr.f32.gmra.mrb[0].mxu0 %v267
        %v338 = vpop.f32.mrb[0].mxu0
        %v339 = vadd.f32 %v263, %v338
        %v340 = vpop.f32.mrb[0].mxu0
        %341 = vmatprep.mubr.f32.mxu0 0.0
        %342 = vmatmul.mubr.f32.gmra.mrb[0].mxu0 %v270
        %v343 = vpop.f32.mrb[0].mxu0
        %v344 = vadd.f32 %v264, %v343
        %v345 = vpop.f32.mrb[0].mxu0
        %346 = vdwg.mxu0
        %s347 = smul.u32 %s23, 16
        %s348 = sadd.s32 %s347, 8
        %s349 = scalar_lea.vmem %s229, %s348 [#allocation2]
        %vm350 = vcmask 261120
        %351 = vst.msk [vmem:[%s349] sm:$0xff] %vm350, %v339
        %352 = vst.msk [vmem:[%s349 + $0x8] sm:$0xff] %vm350, %v344
        %s353 = sand.u32 %s134, 1
        %s354 = scalar_lea.sflag [#allocation3], %s353
        %s355 = sand.u32 %s134, 1
        %s356 = smul.addr %s355, 24
        %s357 = scalar_lea.vmem [#allocation2], %s356
        // Predicated region
        $region41: #{tpu_custom_call.1} parent=35 // pred_check
          %p358 = pneg %p144
        $region42: #{tpu_custom_call.1} parent=35 // pred_check_branch
          %360 = sbr.rel (%p358) target = $region44
        $region43: #{tpu_custom_call.1} parent=35 // pred_region
          %s362 = ssub.s32 384, 384
          %363 = vsyncadd %s354, %s362
          %s364 = smul.addr %s22, 3
          %s365 = smul.addr %s364, 128
          %s366 = scalar_lea.hbm %s4, %s365
          %s367 = sshll.u32 %s357, 4
          %s368 = int_to_ptr.vmem [resolvable:$true] %s367
          %373 = dma.vmem_to_hbm [thread:$0]  %s368, 384, %s366, %s354, 128, 128, 8
        $region44: #{tpu_custom_call.1} parent=35 // pred_fallthru
          _
      $region36: #{tpu_custom_call.1} parent=5 // pred_fallthru
        _
      %p374 = scmp.le.s32.totalorder 2, %s13
      // Predicated region
      $region45: #{tpu_custom_call.1} parent=5 // pred_check
        %p375 = pneg %p374
      $region46: #{tpu_custom_call.1} parent=5 // pred_check_branch
        %377 = sbr.rel (%p375) target = $region48
      $region47: #{tpu_custom_call.1} parent=5 // pred_region
        %s378 = ssub.s32 %s13, 2
        // Predicated region
        $region49: #{tpu_custom_call.1} parent=47 // pred_check
          %p379 = pneg %p150
        $region50: #{tpu_custom_call.1} parent=47 // pred_check_branch
          %381 = sbr.rel (%p379) target = $region52
        $region51: #{tpu_custom_call.1} parent=47 // pred_region
          %s382 = sand.u32 %s135, 1
          %s383 = scalar_lea.sflag [#allocation3], %s382
          %s384 = sand.u32 %s135, 1
          %s385 = smul.addr %s384, 24
          %s386 = scalar_lea.vmem [#allocation2], %s385
          %387 = dma.done %s383, 384
        $region52: #{tpu_custom_call.1} parent=47 // pred_fallthru
          _
      $region48: #{tpu_custom_call.1} parent=5 // pred_fallthru
        _
    $region6: #{tpu_custom_call.1} parent=1 // loop_footer
      %s17 = sadd.s32 1, %s13
    $region7: #{tpu_custom_call.1} parent=1 // loop_footer_branch
      %12 = sbr.rel target = $region3
    $region8: #{tpu_custom_call.1} parent=1 // loop_exit
      _
    %388 = vsyncpa [#allocation3], 1
    %s389 = scalar_lea.sflag [#allocation3], 1
    %390 = vsyncpa %s389, 1

</llo_original>
